<compile_context>
chip_gen: v7x
topology: tpu7x:2x2x1
jax: 0.10.0
libtpu: 0.0.40
codegen_flags: <defaults>
</compile_context>

<pallas_src>
import math

import jax
import jax.numpy as jnp
from jax import lax
from jax.experimental import pallas as pl
from jax.experimental.pallas import tpu as pltpu


# ------------------------------ tuning constants ---------------------------- #

_BLOCK_BYTES = 4 << 20         # ~4 MiB input blocks: DMA time >> per-step overhead
_SMALL_BLOCK_BYTES = 512 << 10
_VMEM_LIMIT_BYTES = 32 << 20   # raises v5e's 16 MiB scoped default; == v6e/v7x default

_SAFE_MODE = False             # latched iff the jnp.flip / Buffered path fails to lower


# --------------------------------- kernels ---------------------------------- #

def _copy_kernel(x_ref, o_ref):
    # Reversal handled entirely by the mirrored input index_map.
    o_ref[...] = x_ref[...]


def _lane_flip_kernel(x_ref, o_ref):
    # Reverse the lane (last) axis of the block; block mirroring does the rest.
    o_ref[...] = jnp.flip(x_ref[...], axis=-1)


def _sublane_flip_kernel(x_ref, o_ref):
    # Reverse the sublane (second-to-last) axis of the block.
    o_ref[...] = jnp.flip(x_ref[...], axis=-2)


def _outer_flip_kernel(x_ref, o_ref):
    # Reverse a non-tiled (outer) axis of the block: whole-tile reorder.
    o_ref[...] = jnp.flip(x_ref[...], axis=1)


# ---- safe-mode kernels: same math without lax.rev (only used if jnp.flip fails) ---- #

def _lane_flip_mxu_kernel(x_ref, o_ref):
    # Lane reverse as a matmul with the exchange (anti-identity) matrix.
    # TODO(synk): exact for floating dtypes only; wide-integer inputs would lose
    # precision through the f32 cast (path only taken if lax.rev does not lower).
    x = x_ref[...].astype(jnp.float32)
    w = x.shape[-1]
    r = lax.broadcasted_iota(jnp.int32, (w, w), 0)
    c = lax.broadcasted_iota(jnp.int32, (w, w), 1)
    exch = (r + c == w - 1).astype(jnp.float32)
    o_ref[...] = jnp.dot(x, exch, preferred_element_type=jnp.float32).astype(o_ref.dtype)


def _sublane_flip_loop_kernel(x_ref, o_ref):
    d = x_ref.shape[1]

    def body(i, carry):
        o_ref[:, pl.ds(i, 1), :] = x_ref[:, pl.ds(d - 1 - i, 1), :]
        return carry

    lax.fori_loop(0, d, body, 0)


def _outer_flip_loop_kernel(x_ref, o_ref):
    d = x_ref.shape[1]

    def body(i, carry):
        o_ref[:, pl.ds(i, 1), :, :] = x_ref[:, pl.ds(d - 1 - i, 1), :, :]
        return carry

    lax.fori_loop(0, d, body, 0)


# --------------------------------- helpers ----------------------------------- #

def _cdiv(a, b):
    return -(-a // b)


def _sublane(itemsize):
    # Native sublane multiple: 8 (>=4B dtypes), 16 (2B), 32 (1B).
    return 8 if itemsize >= 4 else 8 * (4 // itemsize)


def _largest_divisor_leq(n, cap, multiple_of=1):
    """Largest d with d | n, d <= cap and d % multiple_of == 0 (0 if none)."""
    best, i = 0, 1
    while i * i <= n:
        if n % i == 0:
            for d in (i, n // i):
                if d <= cap and d % multiple_of == 0 and d > best:
                    best = d
        i += 1
    return best


def _cparams(n_axes):
    # Pure streaming copy: every grid axis is independent (megacore-shardable).
    return pltpu.CompilerParams(
        dimension_semantics=("parallel",) * n_axes,
        vmem_limit_bytes=_VMEM_LIMIT_BYTES,
    )


def _in_spec(block_shape, index_map, block_bytes, n_steps, safe):
    # Triple-buffer small blocks on long grids to hide DMA issue latency.
    if not safe and block_bytes < _SMALL_BLOCK_BYTES and n_steps > 2:
        try:
            return pl.BlockSpec(block_shape, index_map, pipeline_mode=pl.Buffered(3))
        except Exception:  # pipeline_mode / Buffered unavailable on this jax version
            pass
    return pl.BlockSpec(block_shape, index_map)


# --------------------------- per-case implementations ------------------------ #

def _flip_last(x, safe):
    """Flip the last (lane) axis; x viewed as (R, W) via a free reshape."""
    W = x.shape[-1]
    R = max(1, math.prod(x.shape[:-1]))
    item = x.dtype.itemsize
    sub = _sublane(item)
    bb = _BLOCK_BYTES
    x2 = x.reshape(R, W)

    # Lane block over W (the flipped axis): must divide W exactly so mirrored block
    # indices + the in-block lane reverse compose to an exact global reverse.
    if W * item * min(R, sub) <= bb:
        w_blk = W
    else:
        lane_cap = max(128, (bb // (sub * item)) // 128 * 128)
        w_blk = _largest_divisor_leq(W, lane_cap, multiple_of=128)
        if w_blk == 0:
            # TODO(synk): very large W with no 128-multiple divisor would need manual
            # element-offset DMA to tile exactly; take full width (correct, more VMEM).
            w_blk = W
    if safe and w_blk > 256:
        # Keep the exchange-matrix matmul cheap enough to stay HBM-bound.
        cand = _largest_divisor_leq(W, 256, multiple_of=128)
        if cand:
            w_blk = cand
    nw = W // w_blk

    # Row block (not flipped; partial edge blocks are fine).
    rows = max(1, bb // max(1, w_blk * item))
    if rows >= R or R <= sub:
        r_blk = R
    else:
        r_blk = max(sub, (rows // sub) * sub)

    # Give v7x megacore at least two parallel blocks to shard.
    if nw == 1 and r_blk >= R and R >= 2 * sub:
        r_blk = _cdiv(_cdiv(R, 2), sub) * sub

    grid = (_cdiv(R, r_blk), nw)
    n_steps = grid[0] * grid[1]
    blk_bytes = r_blk * w_blk * item
    kernel = _lane_flip_mxu_kernel if safe else _lane_flip_kernel
    out = pl.pallas_call(
        kernel,
        out_shape=jax.ShapeDtypeStruct((R, W), x.dtype),
        grid=grid,
        in_specs=[_in_spec((r_blk, w_blk), lambda ri, wi: (ri, nw - 1 - wi),
                           blk_bytes, n_steps, safe)],
        out_specs=pl.BlockSpec((r_blk, w_blk), lambda ri, wi: (ri, wi)),
        compiler_params=_cparams(len(grid)),
    )(x2)
    return out.reshape(x.shape)


def _flip_second_minor(x, dim, safe):
    """Flip the second-to-last axis; x viewed as (O, D, L)."""
    O = max(1, math.prod(x.shape[:dim]))
    D = x.shape[dim]
    L = x.shape[-1]
    item = x.dtype.itemsize
    sub = _sublane(item)
    bb = _BLOCK_BYTES
    x3 = x.reshape(O, D, L)

    # Lane block over L (not flipped -> partial edge blocks are fine).
    if L * item * min(D, sub) <= bb:
        l_blk = L
    else:
        l_blk = min(L, max(128, (bb // (sub * item)) // 128 * 128))

    # Flip-axis (sublane) block: must divide D; multiple of `sub` or the full D so the
    # stores stay sublane-dense (no degenerate (.., 1, L) tiles, no masked vst).
    d_budget = max(1, bb // (l_blk * item))
    if D <= max(d_budget, sub):
        d_blk = D
    else:
        d_blk = _largest_divisor_leq(D, d_budget, multiple_of=sub)
        if d_blk == 0:
            # TODO(synk): huge D with no sublane-multiple divisor would need a
            # bulk+remainder split; take the full D instead (correct, more VMEM).
            d_blk = D
    nd = D // d_blk

    # Outer batch (no layout constraint; partial edge blocks fine).
    o_blk = min(O, max(1, bb // (d_blk * l_blk * item)))

    # Give v7x megacore at least two parallel blocks to shard.
    if _cdiv(O, o_blk) * nd * _cdiv(L, l_blk) == 1:
        if O >= 2:
            o_blk = _cdiv(O, 2)
        elif d_blk % (2 * sub) == 0:
            d_blk //= 2
            nd = D // d_blk
        elif L >= 256 and l_blk == L:
            l_blk = _cdiv(_cdiv(L, 2), 128) * 128

    grid = (_cdiv(O, o_blk), nd, _cdiv(L, l_blk))
    n_steps = grid[0] * grid[1] * grid[2]
    blk_bytes = o_blk * d_blk * l_blk * item
    kernel = _sublane_flip_loop_kernel if safe else _sublane_flip_kernel
    out = pl.pallas_call(
        kernel,
        out_shape=jax.ShapeDtypeStruct((O, D, L), x.dtype),
        grid=grid,
        in_specs=[_in_spec((o_blk, d_blk, l_blk),
                           lambda oi, di, li: (oi, nd - 1 - di, li),
                           blk_bytes, n_steps, safe)],
        out_specs=pl.BlockSpec((o_blk, d_blk, l_blk),
                               lambda oi, di, li: (oi, di, li)),
        compiler_params=_cparams(len(grid)),
    )(x3)
    return out.reshape(x.shape)


def _flip_outer(x, dim, safe):
    """Flip an axis that is not one of the last two; x viewed as (O, D, M, L)."""
    O = max(1, math.prod(x.shape[:dim]))
    D = x.shape[dim]
    M = max(1, math.prod(x.shape[dim + 1:-1]))
    L = x.shape[-1]
    item = x.dtype.itemsize
    sub = _sublane(item)
    bb = _BLOCK_BYTES
    x4 = x.reshape(O, D, M, L)

    # Lane block over L (not flipped).
    if L * item * min(M, sub) <= bb:
        l_blk = L
    else:
        l_blk = min(L, max(128, (bb // (sub * item)) // 128 * 128))

    # Sublane block over M (not flipped; partial edge blocks fine).
    m_budget = max(1, bb // (l_blk * item))
    if M <= max(m_budget, sub):
        m_blk = M
    else:
        m_blk = max(sub, (m_budget // sub) * sub)

    # Flip-axis batching: many flip indices per block (d_blk | D; this axis is not one
    # of the two tiled dims, so any divisor keeps the tiles dense).
    d_budget = max(1, bb // (m_blk * l_blk * item))
    if D <= d_budget:
        d_blk = D
    else:
        d_blk = max(1, _largest_divisor_leq(D, d_budget, multiple_of=1))
    nd = D // d_blk

    # Outer batch.
    o_blk = min(O, max(1, bb // (d_blk * m_blk * l_blk * item)))

    # Give v7x megacore at least two parallel blocks to shard.
    if _cdiv(O, o_blk) * nd * _cdiv(M, m_blk) * _cdiv(L, l_blk) == 1:
        if O >= 2:
            o_blk = _cdiv(O, 2)
        elif d_blk % 2 == 0:
            d_blk //= 2
            nd = D // d_blk
        elif M >= 2 * sub and m_blk == M:
            m_blk = _cdiv(_cdiv(M, 2), sub) * sub

    grid = (_cdiv(O, o_blk), nd, _cdiv(M, m_blk), _cdiv(L, l_blk))
    n_steps = grid[0] * grid[1] * grid[2] * grid[3]
    blk_bytes = o_blk * d_blk * m_blk * l_blk * item
    if d_blk > 1:
        kernel = _outer_flip_loop_kernel if safe else _outer_flip_kernel
    else:
        kernel = _copy_kernel
    out = pl.pallas_call(
        kernel,
        out_shape=jax.ShapeDtypeStruct((O, D, M, L), x.dtype),
        grid=grid,
        in_specs=[_in_spec((o_blk, d_blk, m_blk, l_blk),
                           lambda oi, di, mi, li: (oi, nd - 1 - di, mi, li),
                           blk_bytes, n_steps, safe)],
        out_specs=pl.BlockSpec((o_blk, d_blk, m_blk, l_blk),
                               lambda oi, di, mi, li: (oi, di, mi, li)),
        compiler_params=_cparams(len(grid)),
    )(x4)
    return out.reshape(x.shape)


# --------------------------------- public API -------------------------------- #

def flip(x, dim: int):
    """Pallas TPU equivalent of torch.flip(x, [dim])."""
    global _SAFE_MODE
    x = jnp.asarray(x)
    if x.ndim == 0:
        return x
    dim = dim % x.ndim
    if x.size == 0 or x.shape[dim] <= 1:
        return x  # nothing to reverse

    if dim == x.ndim - 1:
        run = lambda safe: _flip_last(x, safe)
    elif dim == x.ndim - 2:
        run = lambda safe: _flip_second_minor(x, dim, safe)
    else:
        run = lambda safe: _flip_outer(x, dim, safe)

    if not _SAFE_MODE:
        try:
            return run(False)
        except Exception:
            # Statically latch the rev-free formulation if jnp.flip / Buffered() do not
            # lower on this jax/Mosaic version (no throwaway probe, no extra traffic).
            _SAFE_MODE = True
    return run(True)


class Flip:
    """Mirror of the PyTorch module: Flip(dim)(x) == torch.flip(x, [dim])."""

    def __init__(self, dim: int):
        self.dim = dim

    def __call__(self, x):
        return flip(x, self.dim)


# ----------------------------------- main ------------------------------------ #

if __name__ == "__main__":
    key = jax.random.PRNGKey(0)
    # NCHW, matching the PyTorch module's usual conv-input convention.
    x = jax.random.normal(key, (2, 4, 16, 16), dtype=jnp.float32)

    # Exercise every code path: dim=3 (lane flip), dim=2 (sublane flip),
    # dim=1 / dim=0 (outer-dim flip with batched flip indices / pure mirroring).
    for d in (3, 2, 1, 0):
        y = jax.block_until_ready(Flip(d)(x))
        assert y.shape == x.shape and y.dtype == x.dtype
        assert jnp.array_equal(y, jnp.flip(x, axis=d)), f"mismatch for dim={d}"

    # 1-D sequence flip with an unaligned length as an extra sanity check.
    t = jax.random.normal(jax.random.PRNGKey(1), (257,), dtype=jnp.float32)
    assert jnp.array_equal(jax.block_until_ready(flip(t, 0)), jnp.flip(t, 0))

    print("KERNEL_OK")
</pallas_src>

<mosaic_0001>
module attributes {stable_mosaic.version = 11 : i64} {
  func.func @_lane_flip_mxu_kernel(%arg0: i32, %arg1: i32, %arg2: memref<64x16xf32, #tpu.memory_space<vmem>>, %arg3: memref<64x16xf32, #tpu.memory_space<vmem>>) attributes {dimension_semantics = [#tpu.dimension_semantics<parallel>, #tpu.dimension_semantics<parallel>], iteration_bounds = array<i64: 2, 1>, scalar_prefetch = 0 : i64, scratch_operands = 0 : i64, tpu.core_type = #tpu.core_type<tc>, window_params = [{transform_indices = @transform_0, window_bounds = array<i64: 64, 16>}, {transform_indices = @transform_1, window_bounds = array<i64: 64, 16>}]} {
    %c0 = arith.constant 0 : index
    %c0_0 = arith.constant 0 : index
    %0 = vector.load %arg2[%c0, %c0_0] : memref<64x16xf32, #tpu.memory_space<vmem>>, vector<64x16xf32>
    %1 = tpu.iota {dimensions = array<i32: 0>} : vector<16x16xi32>
    %2 = tpu.iota {dimensions = array<i32: 1>} : vector<16x16xi32>
    %3 = arith.addi %1, %2 : vector<16x16xi32>
    %c15_i32 = arith.constant 15 : i32
    %4 = vector.broadcast %c15_i32 : i32 to vector<16x16xi32>
    %5 = arith.cmpi eq, %3, %4 : vector<16x16xi32>
    %6 = arith.extui %5 : vector<16x16xi1> to vector<16x16xi32>
    %7 = arith.sitofp %6 : vector<16x16xi32> to vector<16x16xf32>
    %cst = arith.constant dense<0.000000e+00> : vector<64x16xf32>
    %8 = tpu.matmul %0, %7, %cst {dimension_numbers = #tpu.dot_dimension_numbers<[1], [0], [0], [1], [0, 0, 1, 1], [], []>} : vector<64x16xf32>, vector<16x16xf32>, vector<64x16xf32> -> vector<64x16xf32>
    %c0_1 = arith.constant 0 : index
    %c0_2 = arith.constant 0 : index
    %9 = vector.load %arg3[%c0_1, %c0_2] : memref<64x16xf32, #tpu.memory_space<vmem>>, vector<64x16xf32>
    tpu.vector_store %arg3[%c0_1, %c0_2], %8 {strides = array<i32>} : memref<64x16xf32, #tpu.memory_space<vmem>>, vector<64x16xf32>,
    return
  }
  func.func @transform_0(%arg0: i32, %arg1: i32) -> (i32, i32) {
    %c0_i32 = arith.constant 0 : i32
    %0 = arith.subi %c0_i32, %arg1 : i32
    %c0_i32_0 = arith.constant 0 : i32
    return %arg0, %0 : i32, i32
  }
  func.func @transform_1(%arg0: i32, %arg1: i32) -> (i32, i32) {
    %c0_i32 = arith.constant 0 : i32
    return %arg0, %arg1 : i32, i32
  }
}

</mosaic_0001>

<llo_original>
// kernel: tpu_custom_call.1
$region0: #{tpu_custom_call.1}
  #allocation0 [shape = 'u32[]', space=smem, size = 0x4, offset = 0x4, fixed_abs, tag = 'smem constant byte address 0x4 - core index']
  #allocation1 [shape = 'u32[144,128]{1,0:T(1,128)}', space=vmem, size = 0x12000, scoped, tag = 'internal scratch']
  %s0 = inlined_call_operand.vmem [shape: f32[128,16], index: 0, kind: input, shape index: {}]
  %s1 = inlined_call_operand.vmem [shape: f32[128,16], index: 1, kind: output, shape index: {}]
  %s2 = sld [smem:[#allocation0]]
  $region37: #{tpu_custom_call.1} parent=0
    _
  %s4 = ssub.s32 1, %s2
  %s5 = scalar_select 0, %s4, %s2
  loop: start=0, step=1, limit=4
  $region2: #{tpu_custom_call.1} parent=0 // loop_pre_header
    _
  $region3: #{tpu_custom_call.1} parent=0 // loop_header
    %s7 = sphi 0, %s11
    %p8 = scmp.ge.s32.totalorder %s7, 4
    %s14 = sphi 0, %s26
    %s15 = sphi 0, %s22
    %s16 = sphi 0, %s14
    %s17 = sphi 0, %s15
    %s18 = sphi 0, %s16
    %s19 = sphi 0, %s17
    %s33 = sphi 0, %s35
    %s36 = sphi 0, %s33
    %s37 = sphi 0, %s36
    %s53 = sphi 0, %s37
    %s61 = sphi 0, %s63
    %s64 = sphi 0, %s61
    %s65 = sphi 0, %s64
    %s81 = sphi 0, %s65
  $region4: #{tpu_custom_call.1} parent=0 // loop_header_branch
    %10 = sbr.rel (%p8) target = $region8
  $region5: #{tpu_custom_call.1} parent=0 // loop_body
    %s12 = ssub.s32 %s7, 1
    %s13 = ssub.s32 %s7, 2
    %s20 = sadd.s32 1, %s15
    %p21 = scmp.ge.s32.totalorder %s20, 1
    %s22 = scalar_select %p21, 0, %s20
    %s23 = sadd.s32 1, %s14
    %s24 = scalar_select %p21, %s23, %s14
    %p25 = scmp.ge.s32.totalorder %s24, 2
    %s26 = scalar_select %p25, 0, %s24
    %s27 = ssub.s32 0, %s15
    %s28 = ssub.s32 0, %s22
    %s29 = ssub.s32 %s14, %s26
    %s30 = ssub.s32 %s27, %s28
    %s31 = sor.u32 %s29, %s30
    %p32 = scmp.eq.s32.totalorder %s31, 0
    %s34 = sadd.s32 %s33, 1
    %s35 = scalar_select %p32, %s33, %s34
    %p38 = pneg %p32
    %p39 = scmp.eq.s32.totalorder %s7, 1
    %p40 = por %p38, %p39
    %p41 = scmp.ne.s32.totalorder %s33, %s36
    %p42 = scmp.eq.s32.totalorder %s7, 0
    %p43 = por %p41, %p42
    %p44 = scmp.ne.s32.totalorder %s33, %s36
    %p45 = scmp.eq.s32.totalorder %s12, 1
    %p46 = por %p44, %p45
    %p47 = scmp.ne.s32.totalorder %s36, %s37
    %p48 = scmp.eq.s32.totalorder %s12, 0
    %p49 = por %p47, %p48
    %p50 = scmp.ne.s32.totalorder %s36, %s37
    %p51 = scmp.eq.s32.totalorder %s13, 1
    %p52 = por %p50, %p51
    %p54 = scmp.ne.s32.totalorder %s37, %s53
    %p55 = scmp.eq.s32.totalorder %s13, 0
    %p56 = por %p54, %p55
    %s57 = ssub.s32 %s14, %s26
    %s58 = ssub.s32 %s15, %s22
    %s59 = sor.u32 %s57, %s58
    %p60 = scmp.eq.s32.totalorder %s59, 0
    %s62 = sadd.s32 %s61, 1
    %s63 = scalar_select %p60, %s61, %s62
    %p66 = pneg %p60
    %p67 = scmp.eq.s32.totalorder %s7, 1
    %p68 = por %p66, %p67
    %p69 = scmp.ne.s32.totalorder %s61, %s64
    %p70 = scmp.eq.s32.totalorder %s7, 0
    %p71 = por %p69, %p70
    %p72 = scmp.ne.s32.totalorder %s61, %s64
    %p73 = scmp.eq.s32.totalorder %s12, 1
    %p74 = por %p72, %p73
    %p75 = scmp.ne.s32.totalorder %s64, %s65
    %p76 = scmp.eq.s32.totalorder %s12, 0
    %p77 = por %p75, %p76
    %p78 = scmp.ne.s32.totalorder %s64, %s65
    %p79 = scmp.eq.s32.totalorder %s13, 1
    %p80 = por %p78, %p79
    %p82 = scmp.ne.s32.totalorder %s65, %s81
    %p83 = scmp.eq.s32.totalorder %s13, 0
    %p84 = por %p82, %p83
    %p85 = scmp.le.s32.totalorder 1, %s7
    %p86 = scmp.lt.s32.totalorder %s7, 3
    %p87 = pnand %p85, %p86
    %p88 = pneg %p87
    // Predicated region
    $region9: #{tpu_custom_call.1} parent=5 // pred_check
      _
    $region10: #{tpu_custom_call.1} parent=5 // pred_check_branch
      %90 = sbr.rel (%p87) target = $region12
    $region11: #{tpu_custom_call.1} parent=5 // pred_region
      %s91 = ssub.s32 %s7, 1
    $region12: #{tpu_custom_call.1} parent=5 // pred_fallthru
      _
    %p92 = scmp.lt.s32.totalorder %s7, 2
    // Predicated region
    $region13: #{tpu_custom_call.1} parent=5 // pred_check
      %p93 = pneg %p92
    $region14: #{tpu_custom_call.1} parent=5 // pred_check_branch
      %95 = sbr.rel (%p93) target = $region16
    $region15: #{tpu_custom_call.1} parent=5 // pred_region
      // Predicated region
      $region17: #{tpu_custom_call.1} parent=15 // pred_check
        %p96 = pneg %p43
      $region18: #{tpu_custom_call.1} parent=15 // pred_check_branch
        %98 = sbr.rel (%p96) target = $region20
      $region19: #{tpu_custom_call.1} parent=15 // pred_region
        %s99 = ssub.s32 0, %s15
        %s100 = smul.u32 8, %s14
        %p101 = scmp.lt.s32.totalorder %s100, 15
        %s102 = scalar_select %p101, %s100, 15
        %p103 = scmp.lt.s32.totalorder %s99, 0
        %s104 = scalar_select %p103, %s99, 0
        %s105 = sadd.s32 %s104, %s102
        %s106 = smul.addr %s105, 8
        %s107 = scalar_lea.vmem %s0, %s106
        %s108 = ssub.s32 0, %s15
        %s109 = smul.u32 8, %s14
      $region20: #{tpu_custom_call.1} parent=15 // pred_fallthru
        _
    $region16: #{tpu_custom_call.1} parent=5 // pred_fallthru
      _
    %p110 = scmp.le.s32.totalorder 1, %s7
    %p111 = scmp.lt.s32.totalorder %s7, 3
    %p112 = pnand %p110, %p111
    %p113 = pneg %p112
    // Predicated region
    $region21: #{tpu_custom_call.1} parent=5 // pred_check
      _
    $region22: #{tpu_custom_call.1} parent=5 // pred_check_branch
      %115 = sbr.rel (%p112) target = $region24
    $region23: #{tpu_custom_call.1} parent=5 // pred_region
      %s116 = ssub.s32 %s7, 1
      %s117 = ssub.s32 0, %s17
      %s118 = smul.u32 8, %s16
      %p119 = scmp.lt.s32.totalorder %s118, 15
      %s120 = scalar_select %p119, %s118, 15
      %p121 = scmp.lt.s32.totalorder %s117, 0
      %s122 = scalar_select %p121, %s117, 0
      %s123 = sadd.s32 %s122, %s120
      %s124 = smul.addr %s123, 8
      %s125 = scalar_lea.vmem %s0, %s124
      %p126 = pneg %p49
      %p127 = pneg %p46
      %p128 = pneg %p77
      %p129 = pneg %p74
      %s130 = smul.u32 8, %s16
      %p131 = scmp.lt.s32.totalorder %s130, 15
      %s132 = scalar_select %p131, %s130, 15
      %p133 = scmp.lt.s32.totalorder %s17, 0
      %s134 = scalar_select %p133, %s17, 0
      %s135 = sadd.s32 %s134, %s132
      %s136 = smul.addr %s135, 8
      %s137 = scalar_lea.vmem %s1, %s136
      %s138 = ssub.s32 0, %s17
      %s139 = smul.u32 8, %s16
      %p140 = scmp.lt.s32.totalorder %s139, 15
      %s141 = scalar_select %p140, %s139, 15
      %p142 = scmp.lt.s32.totalorder %s138, 0
      %s143 = scalar_select %p142, %s138, 0
      %s144 = sadd.s32 %s143, %s141
      %s145 = smul.addr %s144, 8
      %s146 = scalar_lea.vmem %s0, %s145
      %s147 = ssub.s32 0, %s17
      %s148 = smul.u32 8, %s16
      %s149 = smul.u32 8, %s16
      %p150 = scmp.lt.s32.totalorder %s149, 15
      %s151 = scalar_select %p150, %s149, 15
      %p152 = scmp.lt.s32.totalorder %s17, 0
      %s153 = scalar_select %p152, %s17, 0
      %s154 = sadd.s32 %s153, %s151
      %s155 = smul.addr %s154, 8
      %s156 = scalar_lea.vmem %s1, %s155
      %s157 = smul.u32 8, %s16
      %v158 = vld [vmem:[%s146] sm:$0xff]
      %v159 = vld [vmem:[%s146 + $0x8] sm:$0xff]
      %v160 = vld [vmem:[%s146 + $0x10] sm:$0xff]
      %v161 = vld [vmem:[%s146 + $0x18] sm:$0xff]
      %v162 = vld [vmem:[%s146 + $0x20] sm:$0xff]
      %v163 = vld [vmem:[%s146 + $0x28] sm:$0xff]
      %v164 = vld [vmem:[%s146 + $0x30] sm:$0xff]
      %v165 = vld [vmem:[%s146 + $0x38] sm:$0xff]
      %v166 = vlaneseq
      %v167 = vshrl.u32 %v166, 7
      %v168 = vadd.s32 %v167, 8
      %v169 = vlaneseq
      %v170 = vand.u32 %v169, 127
      %v171 = vadd.s32 %v167, %v170
      %v172 = vadd.s32 %v168, %v170
      %vm173 = vcmp.eq.s32.totalorder %v171, 15
      %vm174 = vcmp.eq.s32.totalorder %v172, 15
      %v175 = vsel %vm173, 1, 0
      %v176 = vsel %vm174, 1, 0
      %v177 = vcvt.s32.f32 %v175
      %v178 = vcvt.s32.f32 %v176
      %vm179 = vcmask 130048
      %v181 = vsel %vm179, %v158, 0
      %v184 = vsel %vm179, %v159, 0
      %v187 = vsel %vm179, %v160, 0
      %v190 = vsel %vm179, %v161, 0
      %v193 = vsel %vm179, %v162, 0
      %v196 = vsel %vm179, %v163, 0
      %v199 = vsel %vm179, %v164, 0
      %v202 = vsel %vm179, %v165, 0
      %204 = vmatprep.subr.mxu0 0.0
      %205 = vmatpush1.msra.mxu0 %v177
      %206 = vmatprep.subr.mxu0 0.0
      %207 = vmatpush1.msra.mxu0 %v178
      %208 = vmatprep.subr.mxu0 0.0
      %209 = vmatpush1.msra.mxu0 0.0
      %210 = vmatprep.subr.mxu0 0.0
      %211 = vmatpush1.msra.mxu0 0.0
      %212 = vmatprep.subr.mxu0 0.0
      %213 = vmatpush1.msra.mxu0 0.0
      %214 = vmatprep.subr.mxu0 0.0
      %215 = vmatpush1.msra.mxu0 0.0
      %216 = vmatprep.subr.mxu0 0.0
      %217 = vmatpush1.msra.mxu0 0.0
      %218 = vmatprep.subr.mxu0 0.0
      %219 = vmatpush1.msra.mxu0 0.0
      %220 = vmatprep.subr.mxu0 0.0
      %221 = vmatpush1.msra.mxu0 0.0
      %222 = vmatprep.subr.mxu0 0.0
      %223 = vmatpush1.msra.mxu0 0.0
      %224 = vmatprep.subr.mxu0 0.0
      %225 = vmatpush1.msra.mxu0 0.0
      %226 = vmatprep.subr.mxu0 0.0
      %227 = vmatpush1.msra.mxu0 0.0
      %228 = vmatprep.subr.mxu0 0.0
      %229 = vmatpush1.msra.mxu0 0.0
      %230 = vmatprep.subr.mxu0 0.0
      %231 = vmatpush1.msra.mxu0 0.0
      %232 = vmatprep.subr.mxu0 0.0
      %233 = vmatpush1.msra.mxu0 0.0
      %234 = vmatprep.subr.mxu0 0.0
      %235 = vmatpush1.msra.mxu0 0.0
      %236 = vmatprep.subr.mxu0 0.0
      %237 = vmatpush1.msra.mxu0 0.0
      %238 = vmatprep.subr.mxu0 0.0
      %239 = vmatpush1.msra.mxu0 0.0
      %240 = vmatprep.subr.mxu0 0.0
      %241 = vmatpush1.msra.mxu0 0.0
      %242 = vmatprep.subr.mxu0 0.0
      %243 = vmatpush1.msra.mxu0 0.0
      %244 = vmatprep.subr.mxu0 0.0
      %245 = vmatpush1.msra.mxu0 0.0
      %246 = vmatprep.subr.mxu0 0.0
      %247 = vmatpush1.msra.mxu0 0.0
      %248 = vmatprep.subr.mxu0 0.0
      %249 = vmatpush1.msra.mxu0 0.0
      %250 = vmatprep.subr.mxu0 0.0
      %251 = vmatpush1.msra.mxu0 0.0
      %252 = vmatprep.subr.mxu0 0.0
      %253 = vmatpush1.msra.mxu0 0.0
      %254 = vmatprep.subr.mxu0 0.0
      %255 = vmatpush1.msra.mxu0 0.0
      %256 = vmatprep.subr.mxu0 0.0
      %257 = vmatpush1.msra.mxu0 0.0
      %258 = vmatprep.subr.mxu0 0.0
      %259 = vmatpush1.msra.mxu0 0.0
      %260 = vmatprep.subr.mxu0 0.0
      %261 = vmatpush1.msra.mxu0 0.0
      %262 = vmatprep.subr.mxu0 0.0
      %263 = vmatpush1.msra.mxu0 0.0
      %264 = vmatprep.subr.mxu0 0.0
      %265 = vmatpush1.msra.mxu0 0.0
      %266 = vmatprep.subr.mxu0 0.0
      %267 = vmatpush1.msra.mxu0 0.0
      %268 = vmatprep.mubr.f32.mxu0 0.0
      %269 = vmatmul.mubr.f32.gmra.mrb[0].mxu0 %v181
      %v270 = vpop.f32.mrb[0].mxu0
      %v271 = vadd.f32 0.0, %v270
      %v272 = vpop.f32.mrb[0].mxu0
      %273 = vmatprep.mubr.f32.mxu0 0.0
      %274 = vmatmul.mubr.f32.gmra.mrb[0].mxu0 %v184
      %v275 = vpop.f32.mrb[0].mxu0
      %v276 = vadd.f32 0.0, %v275
      %v277 = vpop.f32.mrb[0].mxu0
      %278 = vmatprep.mubr.f32.mxu0 0.0
      %279 = vmatmul.mubr.f32.gmra.mrb[0].mxu0 %v187
      %v280 = vpop.f32.mrb[0].mxu0
      %v281 = vadd.f32 0.0, %v280
      %v282 = vpop.f32.mrb[0].mxu0
      %283 = vmatprep.mubr.f32.mxu0 0.0
      %284 = vmatmul.mubr.f32.gmra.mrb[0].mxu0 %v190
      %v285 = vpop.f32.mrb[0].mxu0
      %v286 = vadd.f32 0.0, %v285
      %v287 = vpop.f32.mrb[0].mxu0
      %288 = vmatprep.mubr.f32.mxu0 0.0
      %289 = vmatmul.mubr.f32.gmra.mrb[0].mxu0 %v193
      %v290 = vpop.f32.mrb[0].mxu0
      %v291 = vadd.f32 0.0, %v290
      %v292 = vpop.f32.mrb[0].mxu0
      %293 = vmatprep.mubr.f32.mxu0 0.0
      %294 = vmatmul.mubr.f32.gmra.mrb[0].mxu0 %v196
      %v295 = vpop.f32.mrb[0].mxu0
      %v296 = vadd.f32 0.0, %v295
      %v297 = vpop.f32.mrb[0].mxu0
      %298 = vmatprep.mubr.f32.mxu0 0.0
      %299 = vmatmul.mubr.f32.gmra.mrb[0].mxu0 %v199
      %v300 = vpop.f32.mrb[0].mxu0
      %v301 = vadd.f32 0.0, %v300
      %v302 = vpop.f32.mrb[0].mxu0
      %303 = vmatprep.mubr.f32.mxu0 0.0
      %304 = vmatmul.mubr.f32.gmra.mrb[0].mxu0 %v202
      %v305 = vpop.f32.mrb[0].mxu0
      %v306 = vadd.f32 0.0, %v305
      %v307 = vpop.f32.mrb[0].mxu0
      %308 = vdwg.mxu0
      %309 = vst.msk [vmem:[%s156] sm:$0xff] %vm179, %v271
      %310 = vst.msk [vmem:[%s156 + $0x8] sm:$0xff] %vm179, %v276
      %311 = vst.msk [vmem:[%s156 + $0x10] sm:$0xff] %vm179, %v281
      %312 = vst.msk [vmem:[%s156 + $0x18] sm:$0xff] %vm179, %v286
      %313 = vst.msk [vmem:[%s156 + $0x20] sm:$0xff] %vm179, %v291
      %314 = vst.msk [vmem:[%s156 + $0x28] sm:$0xff] %vm179, %v296
      %315 = vst.msk [vmem:[%s156 + $0x30] sm:$0xff] %vm179, %v301
      %316 = vst.msk [vmem:[%s156 + $0x38] sm:$0xff] %vm179, %v306
      %s317 = smul.u32 8, %s16
      %p318 = scmp.lt.s32.totalorder %s317, 15
      %s319 = scalar_select %p318, %s317, 15
      %p320 = scmp.lt.s32.totalorder %s17, 0
      %s321 = scalar_select %p320, %s17, 0
      %s322 = sadd.s32 %s321, %s319
      %s323 = smul.addr %s322, 8
      %s324 = scalar_lea.vmem %s1, %s323
      // Predicated region
      $region25: #{tpu_custom_call.1} parent=23 // pred_check
        %p325 = pneg %p74
      $region26: #{tpu_custom_call.1} parent=23 // pred_check_branch
        %327 = sbr.rel (%p325) target = $region28
      $region27: #{tpu_custom_call.1} parent=23 // pred_region
        %s328 = smul.u32 8, %s16
      $region28: #{tpu_custom_call.1} parent=23 // pred_fallthru
        _
    $region24: #{tpu_custom_call.1} parent=5 // pred_fallthru
      _
    %p329 = scmp.le.s32.totalorder 2, %s7
    // Predicated region
    $region29: #{tpu_custom_call.1} parent=5 // pred_check
      %p330 = pneg %p329
    $region30: #{tpu_custom_call.1} parent=5 // pred_check_branch
      %332 = sbr.rel (%p330) target = $region32
    $region31: #{tpu_custom_call.1} parent=5 // pred_region
      %s333 = ssub.s32 %s7, 2
      // Predicated region
      $region33: #{tpu_custom_call.1} parent=31 // pred_check
        %p334 = pneg %p80
      $region34: #{tpu_custom_call.1} parent=31 // pred_check_branch
        %336 = sbr.rel (%p334) target = $region36
      $region35: #{tpu_custom_call.1} parent=31 // pred_region
        %s337 = smul.u32 8, %s18
        %p338 = scmp.lt.s32.totalorder %s337, 15
        %s339 = scalar_select %p338, %s337, 15
        %p340 = scmp.lt.s32.totalorder %s19, 0
        %s341 = scalar_select %p340, %s19, 0
        %s342 = sadd.s32 %s341, %s339
        %s343 = smul.addr %s342, 8
        %s344 = scalar_lea.vmem %s1, %s343
      $region36: #{tpu_custom_call.1} parent=31 // pred_fallthru
        _
    $region32: #{tpu_custom_call.1} parent=5 // pred_fallthru
      _
  $region6: #{tpu_custom_call.1} parent=0 // loop_footer
    %s11 = sadd.s32 1, %s7
  $region7: #{tpu_custom_call.1} parent=0 // loop_footer_branch
    %6 = sbr.rel target = $region3
  $region8: #{tpu_custom_call.1} parent=0 // loop_exit
    _

</llo_original>
